<compile_context>
chip_gen: v7x
topology: tpu7x:2x2x1
jax: 0.10.0
libtpu: 0.0.40
codegen_flags: <defaults>
</compile_context>

<pallas_src>
import functools

import jax
import jax.numpy as jnp
from jax.experimental import pallas as pl
from jax.experimental.pallas import tpu as pltpu


# ---------------------------------------------------------------------------
# Parameter packing helpers
# ---------------------------------------------------------------------------

def _round_up(n: int, m: int) -> int:
    return ((n + m - 1) // m) * m


def _pack_rows(arrays, dtype, row_align=16):
    """Vertically pack 2-D arrays of equal width into one slab.

    Each segment starts at a row offset that is a multiple of `row_align`
    (16 = bf16 sublane tile) so in-kernel static slices stay tile-aligned.
    Returns (slab, offsets).
    """
    width = arrays[0].shape[1]
    offsets = []
    rows = 0
    for a in arrays:
        assert a.shape[1] == width, "all packed segments must share a width"
        offsets.append(rows)
        rows += _round_up(a.shape[0], row_align)
    slab = jnp.zeros((rows, width), dtype)
    for off, a in zip(offsets, arrays):
        slab = slab.at[off:off + a.shape[0], :].set(a.astype(dtype))
    return slab, tuple(offsets)


def pack_params(params, dtype=jnp.bfloat16):
    """Fuse the dueling heads, fold the aggregation, pack into two slabs.

    Slab A (width = hidden):  w1, b1, w2, b2, [wv1|wa1] (pad), [bv1|ba1] (pad)
    Slab B (width = out):     whq = block-diag([wv2; wa2]) @ T,  bhq = [bv2|ba2] @ T
    where T ([1+out, out], T[0,:]=1, T[1+i,j]=delta(i,j)-1/out) folds
    Q = value + adv - mean(adv) into the final linear layer (exact in f32;
    only a bf16 re-round of the folded head weights).
    """
    f32 = jnp.float32
    hidden = params["w2"].shape[0]
    half = params["wv1"].shape[1]
    output_size = params["wa2"].shape[1]

    # Fused head layer 1: one dot produces [v1 | a1].  Zero-pad to width
    # `hidden` when hidden is odd (2*half < hidden) so all segments share width.
    pad = hidden - 2 * half
    wh1 = jnp.concatenate([params["wv1"], params["wa1"]], axis=1)
    bh1 = jnp.concatenate([params["bv1"], params["ba1"]], axis=1)
    if pad:
        wh1 = jnp.pad(wh1, ((0, 0), (0, pad)))
        bh1 = jnp.pad(bh1, ((0, 0), (0, pad)))

    # Fused head layer 2 (block-diagonal): one dot produces [value | adv].
    wh2 = jnp.zeros((hidden, 1 + output_size), f32)
    wh2 = wh2.at[:half, 0:1].set(params["wv2"].astype(f32))
    wh2 = wh2.at[half:2 * half, 1:].set(params["wa2"].astype(f32))
    bh2 = jnp.concatenate([params["bv2"], params["ba2"]], axis=1).astype(f32)

    # Fold the dueling aggregation:  Q = [value | adv] @ T.
    T = jnp.concatenate(
        [jnp.ones((1, output_size), f32),
         jnp.eye(output_size, dtype=f32) - 1.0 / output_size], axis=0)
    whq = wh2 @ T                                  # [hidden, out]
    bhq = bh2 @ T                                  # [1, out]

    feat_slab, off_feat = _pack_rows(
        [params["w1"], params["b1"], params["w2"], params["b2"], wh1, bh1], dtype)
    head_slab, off_head = _pack_rows([whq, bhq], dtype)
    return feat_slab, off_feat, head_slab, off_head


# ---------------------------------------------------------------------------
# Kernel
# ---------------------------------------------------------------------------

def dueling_dqn_kernel(
    x_ref, feat_ref, head_ref, out_ref, *,
    input_size, hidden_size, off_feat, off_head,
):
    """4 MXU matmuls, bf16 operands, f32 accumulation; epilogue-free.

    Each weight-slab slice is read right next to its consuming dot (slab
    slices are eager loads, not views) so live ranges stay short and the
    loads overlap the preceding MXU pass.
    """
    f32, bf16 = jnp.float32, jnp.bfloat16
    o_w1, o_b1, o_w2, o_b2, o_wh1, o_bh1 = off_feat
    o_whq, o_bhq = off_head

    # feature_layer: Linear -> ReLU   (in-kernel f32 -> bf16 cast of x)
    x = x_ref[...].astype(bf16)
    h = jnp.dot(x, feat_ref[o_w1:o_w1 + input_size, :],
                preferred_element_type=f32)
    h = jnp.maximum(h + feat_ref[o_b1:o_b1 + 1, :].astype(f32), 0.0)

    # feature_layer: Linear -> ReLU
    h = jnp.dot(h.astype(bf16), feat_ref[o_w2:o_w2 + hidden_size, :],
                preferred_element_type=f32)
    h = jnp.maximum(h + feat_ref[o_b2:o_b2 + 1, :].astype(f32), 0.0)

    # Fused value/advantage first layer: one dot gives [v1 | a1].
    h = jnp.dot(h.astype(bf16), feat_ref[o_wh1:o_wh1 + hidden_size, :],
                preferred_element_type=f32)
    h = jnp.maximum(h + feat_ref[o_bh1:o_bh1 + 1, :].astype(f32), 0.0)

    # Final layer with the dueling aggregation folded in -> Q directly.
    q = jnp.dot(h.astype(bf16), head_ref[o_whq:o_whq + hidden_size, :],
                preferred_element_type=f32)
    q = q + head_ref[o_bhq:o_bhq + 1, :].astype(f32)
    out_ref[...] = q.astype(out_ref.dtype)


# ---------------------------------------------------------------------------
# Wrapper
# ---------------------------------------------------------------------------

def dueling_dqn_forward(x, packed, *, input_size, hidden_size, output_size,
                        batch_tile=128, out_dtype=jnp.float32,
                        single_buffer_weights=True):
    """Run the Dueling DQN forward pass as a Pallas TPU kernel.

    Args:
        x: [B, input_size] float32 (cast to bf16 inside the kernel).
        packed: output of pack_params().
        out_dtype: output dtype (bf16 halves writeback of the narrow output).
    Returns:
        [B, output_size] Q-values in `out_dtype`.
    """
    feat_slab, off_feat, head_slab, off_head = packed
    B = x.shape[0]

    kernel = functools.partial(
        dueling_dqn_kernel,
        input_size=input_size, hidden_size=hidden_size,
        off_feat=off_feat, off_head=off_head)

    feat_bytes = feat_slab.size * feat_slab.dtype.itemsize
    head_bytes = head_slab.size * head_slab.dtype.itemsize

    def _vmem_budget(rows):
        # slabs (worst case double-buffered) + double-buffered x/out tiles +
        # f32 intermediates, with 2x headroom; clamp to [32 MiB, 64 MiB] so the
        # limit is explicit on v5e (16 MiB default) and safe on v7x (64 MiB).
        io = (2 * rows * input_size * x.dtype.itemsize
              + 2 * rows * output_size * jnp.dtype(out_dtype).itemsize)
        inter = 3 * rows * hidden_size * 4
        need = 2 * (2 * (feat_bytes + head_bytes) + io + inter)
        return int(min(max(need, 32 << 20), 64 << 20))

    if B >= 2 * batch_tile:
        # Grid path: pad the batch to a tile multiple, tile over the batch.
        # batch_tile=128 keeps >=4 steps for modest B (pipeline depth on v5e,
        # even multi-step split across v7x's two TensorCores).
        n_tiles = pl.cdiv(B, batch_tile)
        Bp = n_tiles * batch_tile
        xg = x if Bp == B else jnp.pad(x, ((0, Bp - B), (0, 0)))

        if single_buffer_weights:
            # Constant index_map -> double-buffering the slabs is pure VMEM waste.
            w_kwargs = dict(pipeline_mode=pl.Buffered(1))
        else:
            w_kwargs = {}

        q = pl.pallas_call(
            kernel,
            out_shape=jax.ShapeDtypeStruct((Bp, output_size), out_dtype),
            grid=(n_tiles,),
            in_specs=[
                pl.BlockSpec((batch_tile, input_size), lambda i: (i, 0)),
                pl.BlockSpec(feat_slab.shape, lambda i: (0, 0), **w_kwargs),
                pl.BlockSpec(head_slab.shape, lambda i: (0, 0), **w_kwargs),
            ],
            out_specs=pl.BlockSpec((batch_tile, output_size), lambda i: (i, 0)),
            compiler_params=pltpu.CompilerParams(
                dimension_semantics=("parallel",),
                vmem_limit_bytes=_vmem_budget(batch_tile)),
        )(xg, feat_slab, head_slab)
        return q[:B] if Bp != B else q

    # Small-batch path: single invocation, everything resident in VMEM.
    return pl.pallas_call(
        kernel,
        out_shape=jax.ShapeDtypeStruct((B, output_size), out_dtype),
        grid=(),
        in_specs=[
            pl.BlockSpec((B, input_size), lambda: (0, 0)),
            pl.BlockSpec(feat_slab.shape, lambda: (0, 0)),
            pl.BlockSpec(head_slab.shape, lambda: (0, 0)),
        ],
        out_specs=pl.BlockSpec((B, output_size), lambda: (0, 0)),
        compiler_params=pltpu.CompilerParams(
            vmem_limit_bytes=_vmem_budget(max(B, 8))),
    )(x, feat_slab, head_slab)


# ---------------------------------------------------------------------------
# Parameter init + references
# ---------------------------------------------------------------------------

def init_params(key, input_size, hidden_size, output_size):
    """Deterministic synthetic parameter init (PyTorch-Linear-like uniform)."""
    half = hidden_size // 2

    def linear(key, fan_in, fan_out):
        kw, kb = jax.random.split(key)
        bound = 1.0 / jnp.sqrt(fan_in)
        w = jax.random.uniform(kw, (fan_in, fan_out), jnp.float32, -bound, bound)
        b = jax.random.uniform(kb, (1, fan_out), jnp.float32, -bound, bound)
        return w, b

    keys = jax.random.split(key, 6)
    w1, b1 = linear(keys[0], input_size, hidden_size)
    w2, b2 = linear(keys[1], hidden_size, hidden_size)
    wv1, bv1 = linear(keys[2], hidden_size, half)
    wv2, bv2 = linear(keys[3], half, 1)
    wa1, ba1 = linear(keys[4], hidden_size, half)
    wa2, ba2 = linear(keys[5], half, output_size)

    return dict(
        w1=w1, b1=b1, w2=w2, b2=b2,
        wv1=wv1, bv1=bv1, wv2=wv2, bv2=bv2,
        wa1=wa1, ba1=ba1, wa2=wa2, ba2=ba2,
    )


def reference_forward_f32(x, p):
    """Plain-JAX f32 reference of the original PyTorch module."""
    h1 = jnp.maximum(x @ p["w1"] + p["b1"], 0.0)
    feat = jnp.maximum(h1 @ p["w2"] + p["b2"], 0.0)
    v1 = jnp.maximum(feat @ p["wv1"] + p["bv1"], 0.0)
    value = v1 @ p["wv2"] + p["bv2"]
    a1 = jnp.maximum(feat @ p["wa1"] + p["ba1"], 0.0)
    adv = a1 @ p["wa2"] + p["ba2"]
    return value + (adv - adv.mean(axis=1, keepdims=True))


def reference_forward_packed(x, packed, *, input_size, hidden_size):
    """Plain-JAX mirror of the kernel math (bf16 operands, f32 accumulate)."""
    feat_slab, off_feat, head_slab, off_head = packed
    f32, bf16 = jnp.float32, jnp.bfloat16
    o_w1, o_b1, o_w2, o_b2, o_wh1, o_bh1 = off_feat
    o_whq, o_bhq = off_head

    w1 = feat_slab[o_w1:o_w1 + input_size]
    b1 = feat_slab[o_b1:o_b1 + 1].astype(f32)
    w2 = feat_slab[o_w2:o_w2 + hidden_size]
    b2 = feat_slab[o_b2:o_b2 + 1].astype(f32)
    wh1 = feat_slab[o_wh1:o_wh1 + hidden_size]
    bh1 = feat_slab[o_bh1:o_bh1 + 1].astype(f32)
    whq = head_slab[o_whq:o_whq + hidden_size]
    bhq = head_slab[o_bhq:o_bhq + 1].astype(f32)

    xb = x.astype(bf16)
    h = jnp.maximum(jnp.dot(xb, w1, preferred_element_type=f32) + b1, 0.0)
    h = jnp.maximum(jnp.dot(h.astype(bf16), w2, preferred_element_type=f32) + b2, 0.0)
    h = jnp.maximum(jnp.dot(h.astype(bf16), wh1, preferred_element_type=f32) + bh1, 0.0)
    return jnp.dot(h.astype(bf16), whq, preferred_element_type=f32) + bhq


# ---------------------------------------------------------------------------
# Demo / correctness check
# ---------------------------------------------------------------------------

if __name__ == "__main__":
    key = jax.random.PRNGKey(0)
    k_x, k_p, k_x2, k_p2 = jax.random.split(key, 4)

    batch = 8
    input_size = 16
    hidden_size = 32
    output_size = 8

    x = jax.random.normal(k_x, (batch, input_size), jnp.float32)
    params = init_params(k_p, input_size, hidden_size, output_size)
    packed = pack_params(params)

    # --- Small-batch path (single invocation, all VMEM-resident) ------------
    q = dueling_dqn_forward(
        x, packed,
        input_size=input_size, hidden_size=hidden_size, output_size=output_size)
    q = jax.block_until_ready(q)
    assert q.shape == (batch, output_size)

    q_pk = reference_forward_packed(x, packed, input_size=input_size,
                                    hidden_size=hidden_size)
    assert jnp.allclose(q, q_pk, atol=2e-3, rtol=2e-3), "mismatch vs packed reference"

    q_f32 = reference_forward_f32(x, params)
    assert jnp.allclose(q, q_f32, atol=5e-2, rtol=5e-2), "mismatch vs f32 reference"

    # --- Grid path: non-multiple batch (cdiv grid + padded tail), bf16 out --
    big_batch = 500
    xb = jax.random.normal(k_x2, (big_batch, input_size), jnp.float32)
    fwd_big = functools.partial(
        dueling_dqn_forward, xb, packed,
        input_size=input_size, hidden_size=hidden_size, output_size=output_size,
        batch_tile=128, out_dtype=jnp.bfloat16)
    try:
        qb = fwd_big(single_buffer_weights=True)
    except Exception:
        # This jax build does not support pipeline_mode=pl.Buffered(1) on
        # top-level pallas_call BlockSpecs; fall back to default buffering.
        qb = fwd_big(single_buffer_weights=False)
    qb = jax.block_until_ready(qb)
    assert qb.shape == (big_batch, output_size)

    qb_pk = reference_forward_packed(xb, packed, input_size=input_size,
                                     hidden_size=hidden_size)
    assert jnp.allclose(qb.astype(jnp.float32), qb_pk, atol=3e-2, rtol=3e-2), \
        "grid-path mismatch vs packed reference"

    # --- Odd hidden_size (fused head zero-padded at pack time) --------------
    hidden_odd = 33
    params_odd = init_params(k_p2, input_size, hidden_odd, output_size)
    packed_odd = pack_params(params_odd)
    q_odd = dueling_dqn_forward(
        x, packed_odd,
        input_size=input_size, hidden_size=hidden_odd, output_size=output_size)
    q_odd = jax.block_until_ready(q_odd)
    q_odd_ref = reference_forward_f32(x, params_odd)
    assert jnp.allclose(q_odd, q_odd_ref, atol=5e-2, rtol=5e-2), \
        "odd-hidden mismatch vs f32 reference"

    print("KERNEL_OK")
</pallas_src>

<mosaic_0001>
module attributes {stable_mosaic.version = 11 : i64} {
  func.func @dueling_dqn_kernel(%arg0: memref<8x16xf32, #tpu.memory_space<vmem>>, %arg1: memref<128x32xbf16, #tpu.memory_space<vmem>>, %arg2: memref<48x8xbf16, #tpu.memory_space<vmem>>, %arg3: memref<8x8xf32, #tpu.memory_space<vmem>>) attributes {dimension_semantics = [], scalar_prefetch = 0 : i64, scratch_operands = 0 : i64, tpu.core_type = #tpu.core_type<tc>} {
    %c0 = arith.constant 0 : index
    %c0_0 = arith.constant 0 : index
    %0 = vector.load %arg0[%c0, %c0_0] : memref<8x16xf32, #tpu.memory_space<vmem>>, vector<8x16xf32>
    %1 = arith.truncf %0 : vector<8x16xf32> to vector<8x16xbf16>
    %c0_1 = arith.constant 0 : index
    %c0_2 = arith.constant 0 : index
    %2 = vector.load %arg1[%c0_1, %c0_2] : memref<128x32xbf16, #tpu.memory_space<vmem>>, vector<16x32xbf16>
    %cst = arith.constant dense<0.000000e+00> : vector<8x32xf32>
    %3 = tpu.matmul %1, %2, %cst {dimension_numbers = #tpu.dot_dimension_numbers<[1], [0], [0], [1], [0, 0, 1, 1], [], []>} : vector<8x16xbf16>, vector<16x32xbf16>, vector<8x32xf32> -> vector<8x32xf32>
    %c16 = arith.constant 16 : index
    %c0_3 = arith.constant 0 : index
    %4 = vector.load %arg1[%c16, %c0_3] : memref<128x32xbf16, #tpu.memory_space<vmem>>, vector<1x32xbf16>
    %5 = arith.extf %4 : vector<1x32xbf16> to vector<1x32xf32>
    %6 = vector.broadcast %5 : vector<1x32xf32> to vector<8x32xf32>
    %7 = arith.addf %3, %6 : vector<8x32xf32>
    %cst_4 = arith.constant 0.000000e+00 : f32
    %8 = vector.broadcast %cst_4 : f32 to vector<8x32xf32>
    %9 = arith.maximumf %7, %8 : vector<8x32xf32>
    %10 = arith.truncf %9 : vector<8x32xf32> to vector<8x32xbf16>
    %c32 = arith.constant 32 : index
    %c0_5 = arith.constant 0 : index
    %11 = vector.load %arg1[%c32, %c0_5] : memref<128x32xbf16, #tpu.memory_space<vmem>>, vector<32x32xbf16>
    %cst_6 = arith.constant dense<0.000000e+00> : vector<8x32xf32>
    %12 = tpu.matmul %10, %11, %cst_6 {dimension_numbers = #tpu.dot_dimension_numbers<[1], [0], [0], [1], [0, 0, 1, 1], [], []>} : vector<8x32xbf16>, vector<32x32xbf16>, vector<8x32xf32> -> vector<8x32xf32>
    %c64 = arith.constant 64 : index
    %c0_7 = arith.constant 0 : index
    %13 = vector.load %arg1[%c64, %c0_7] : memref<128x32xbf16, #tpu.memory_space<vmem>>, vector<1x32xbf16>
    %14 = arith.extf %13 : vector<1x32xbf16> to vector<1x32xf32>
    %15 = vector.broadcast %14 : vector<1x32xf32> to vector<8x32xf32>
    %16 = arith.addf %12, %15 : vector<8x32xf32>
    %cst_8 = arith.constant 0.000000e+00 : f32
    %17 = vector.broadcast %cst_8 : f32 to vector<8x32xf32>
    %18 = arith.maximumf %16, %17 : vector<8x32xf32>
    %19 = arith.truncf %18 : vector<8x32xf32> to vector<8x32xbf16>
    %c80 = arith.constant 80 : index
    %c0_9 = arith.constant 0 : index
    %20 = vector.load %arg1[%c80, %c0_9] : memref<128x32xbf16, #tpu.memory_space<vmem>>, vector<32x32xbf16>
    %cst_10 = arith.constant dense<0.000000e+00> : vector<8x32xf32>
    %21 = tpu.matmul %19, %20, %cst_10 {dimension_numbers = #tpu.dot_dimension_numbers<[1], [0], [0], [1], [0, 0, 1, 1], [], []>} : vector<8x32xbf16>, vector<32x32xbf16>, vector<8x32xf32> -> vector<8x32xf32>
    %c112 = arith.constant 112 : index
    %c0_11 = arith.constant 0 : index
    %22 = vector.load %arg1[%c112, %c0_11] : memref<128x32xbf16, #tpu.memory_space<vmem>>, vector<1x32xbf16>
    %23 = arith.extf %22 : vector<1x32xbf16> to vector<1x32xf32>
    %24 = vector.broadcast %23 : vector<1x32xf32> to vector<8x32xf32>
    %25 = arith.addf %21, %24 : vector<8x32xf32>
    %cst_12 = arith.constant 0.000000e+00 : f32
    %26 = vector.broadcast %cst_12 : f32 to vector<8x32xf32>
    %27 = arith.maximumf %25, %26 : vector<8x32xf32>
    %28 = arith.truncf %27 : vector<8x32xf32> to vector<8x32xbf16>
    %c0_13 = arith.constant 0 : index
    %c0_14 = arith.constant 0 : index
    %29 = vector.load %arg2[%c0_13, %c0_14] : memref<48x8xbf16, #tpu.memory_space<vmem>>, vector<32x8xbf16>
    %cst_15 = arith.constant dense<0.000000e+00> : vector<8x8xf32>
    %30 = tpu.matmul %28, %29, %cst_15 {dimension_numbers = #tpu.dot_dimension_numbers<[1], [0], [0], [1], [0, 0, 1, 1], [], []>} : vector<8x32xbf16>, vector<32x8xbf16>, vector<8x8xf32> -> vector<8x8xf32>
    %c32_16 = arith.constant 32 : index
    %c0_17 = arith.constant 0 : index
    %31 = vector.load %arg2[%c32_16, %c0_17] : memref<48x8xbf16, #tpu.memory_space<vmem>>, vector<1x8xbf16>
    %32 = arith.extf %31 : vector<1x8xbf16> to vector<1x8xf32>
    %33 = vector.broadcast %32 : vector<1x8xf32> to vector<8x8xf32>
    %34 = arith.addf %30, %33 : vector<8x8xf32>
    %c0_18 = arith.constant 0 : index
    %c0_19 = arith.constant 0 : index
    %35 = vector.load %arg3[%c0_18, %c0_19] : memref<8x8xf32, #tpu.memory_space<vmem>>, vector<8x8xf32>
    tpu.vector_store %arg3[%c0_18, %c0_19], %34 {strides = array<i32>} : memref<8x8xf32, #tpu.memory_space<vmem>>, vector<8x8xf32>,
    return
  }
}

</mosaic_0001>

<llo_original>
// kernel: tpu_custom_call.1
$region0: #{tpu_custom_call.1}
  #allocation0 [shape = 'u32[]', space=smem, size = 0x4, offset = 0x4, fixed_abs, tag = 'smem constant byte address 0x4 - core index']
  #allocation1 [shape = 'u32[144,128]{1,0:T(1,128)}', space=vmem, size = 0x12000, scoped, tag = 'internal scratch']
  %s0 = inlined_call_operand.vmem [shape: f32[8,16], index: 0, kind: input, shape index: {}]
  %s1 = inlined_call_operand.vmem [shape: bf16[128,32], index: 1, kind: input, shape index: {}]
  %s2 = inlined_call_operand.vmem [shape: bf16[48,8], index: 2, kind: input, shape index: {}]
  %s3 = inlined_call_operand.hbm [shape: f32[8,8], index: 3, kind: output, shape index: {}]
  %s4 = sld [smem:[#allocation0]]
  $region22: #{tpu_custom_call.1} parent=0
    _
  %s6 = ssub.s32 1, %s4
  %s7 = scalar_select 0, %s6, %s4
  $region1: #{tpu_custom_call.1} parent=0
    #allocation2 [shape = 'u8[4096]{0}', space=vmem, size = 0x1000, scoped, tag = 'output window, operand 0, single buffered']
    #allocation3 [shape = 's32[1]{0}', space=sflag, size = 0x4, scoped, tag = 'scoped memory for tpu_custom_call.1']
    %8 = vsyncpa [#allocation3], 0
    // Predicated region
    $region2: #{tpu_custom_call.1} parent=1 // pred_check
      _
    $region3: #{tpu_custom_call.1} parent=1 // pred_check_branch
      %10 = sbr.rel (0) target = $region5
    $region4: #{tpu_custom_call.1} parent=1 // pred_region
      _
    $region5: #{tpu_custom_call.1} parent=1 // pred_fallthru
      _
    // Predicated region
    $region6: #{tpu_custom_call.1} parent=1 // pred_check
      _
    $region7: #{tpu_custom_call.1} parent=1 // pred_check_branch
      %12 = sbr.rel (0) target = $region9
    $region8: #{tpu_custom_call.1} parent=1 // pred_region
      _
    $region9: #{tpu_custom_call.1} parent=1 // pred_fallthru
      _
    // Predicated region
    $region10: #{tpu_custom_call.1} parent=1 // pred_check
      _
    $region11: #{tpu_custom_call.1} parent=1 // pred_check_branch
      %14 = sbr.rel (0) target = $region13
    $region12: #{tpu_custom_call.1} parent=1 // pred_region
      _
    $region13: #{tpu_custom_call.1} parent=1 // pred_fallthru
      _
    %v16 = vld [vmem:[%s0] sm:$0xff]
    %v17 = vpack.c.bf16 %v16, %v16
    %v18 = vld [vmem:[%s1] sm:$0xf]
    %v19 = vld [vmem:[%s1 + $0x4] sm:$0xf]
    %v20 = vld [vmem:[%s1 + $0x8] sm:$0x1]
    %v21 = vunpack.c.l.bf16 %v20
    %v22 = vlaneseq
    %v23 = vshrl.u32 %v22, 7
    %v24 = vsub.s32 0, %v23
    %v25 = vrot.slane %v21, %v24
    %v28 = vunpack.c.l.b16 %v18
    %v29 = vunpack.c.l.b16 %v19
    %v30 = vpack.c.b16 %v29, %v28
    %vm32 = vcmask 130048
    %v34 = vsel %vm32, %v17, 0
    %36 = vmatprep.subr.bf16.mxu0 0
    %37 = vmatpush1.bf16.msra.mxu0 %v30
    %38 = vmatprep.subr.bf16.mxu0 0
    %39 = vmatpush1.bf16.msra.mxu0 0
    %40 = vmatprep.subr.bf16.mxu0 0
    %41 = vmatpush1.bf16.msra.mxu0 0
    %42 = vmatprep.subr.bf16.mxu0 0
    %43 = vmatpush1.bf16.msra.mxu0 0
    %44 = vmatprep.subr.bf16.mxu0 0
    %45 = vmatpush1.bf16.msra.mxu0 0
    %46 = vmatprep.subr.bf16.mxu0 0
    %47 = vmatpush1.bf16.msra.mxu0 0
    %48 = vmatprep.subr.bf16.mxu0 0
    %49 = vmatpush1.bf16.msra.mxu0 0
    %50 = vmatprep.subr.bf16.mxu0 0
    %51 = vmatpush1.bf16.msra.mxu0 0
    %52 = vmatprep.subr.bf16.mxu0 0
    %53 = vmatpush1.bf16.msra.mxu0 0
    %54 = vmatprep.subr.bf16.mxu0 0
    %55 = vmatpush1.bf16.msra.mxu0 0
    %56 = vmatprep.subr.bf16.mxu0 0
    %57 = vmatpush1.bf16.msra.mxu0 0
    %58 = vmatprep.subr.bf16.mxu0 0
    %59 = vmatpush1.bf16.msra.mxu0 0
    %60 = vmatprep.subr.bf16.mxu0 0
    %61 = vmatpush1.bf16.msra.mxu0 0
    %62 = vmatprep.subr.bf16.mxu0 0
    %63 = vmatpush1.bf16.msra.mxu0 0
    %64 = vmatprep.subr.bf16.mxu0 0
    %65 = vmatpush1.bf16.msra.mxu0 0
    %66 = vmatprep.subr.bf16.mxu0 0
    %67 = vmatpush1.bf16.msra.mxu0 0
    %68 = vmatprep.mubr.bf16.mxu0 0
    %69 = vmatmul.mubr.bf16.gmra.mrb[0].mxu0 %v34
    %v70 = vpop.f32.mrb[0].mxu0
    %v71 = vadd.f32 %v25, %v70
    %v72 = vpop.f32.mrb[0].mxu0
    %v73 = vpop.f32.mrb[0].mxu0
    %v74 = vpop.f32.mrb[0].mxu0
    %75 = vdwg.mxu0
    %v76 = vmax.f32 %v71, 0.0
    %v77 = vpack.c.bf16 %v76, %v76
    %v78 = vld [vmem:[%s1 + $0x10] sm:$0xf]
    %v79 = vld [vmem:[%s1 + $0x14] sm:$0xf]
    %v80 = vld [vmem:[%s1 + $0x18] sm:$0xf]
    %v81 = vld [vmem:[%s1 + $0x1c] sm:$0xf]
    %v82 = vld [vmem:[%s1 + $0x20] sm:$0x1]
    %v83 = vunpack.c.l.bf16 %v82
    %v84 = vlaneseq
    %v85 = vshrl.u32 %v84, 7
    %v86 = vsub.s32 0, %v85
    %v87 = vrot.slane %v83, %v86
    %v92 = vunpack.c.l.b16 %v78
    %v93 = vunpack.c.l.b16 %v79
    %v94 = vunpack.c.l.b16 %v80
    %v95 = vunpack.c.l.b16 %v81
    %v96 = vpack.c.b16 %v93, %v92
    %v97 = vpack.c.b16 %v95, %v94
    %vm100 = vcmask 261120
    %v102 = vsel %vm100, %v77, 0
    %104 = vmatprep.subr.bf16.mxu0 0
    %105 = vmatpush1.bf16.msra.mxu0 %v96
    %106 = vmatprep.subr.bf16.mxu0 0
    %107 = vmatpush1.bf16.msra.mxu0 %v97
    %108 = vmatprep.subr.bf16.mxu0 0
    %109 = vmatpush1.bf16.msra.mxu0 0
    %110 = vmatprep.subr.bf16.mxu0 0
    %111 = vmatpush1.bf16.msra.mxu0 0
    %112 = vmatprep.subr.bf16.mxu0 0
    %113 = vmatpush1.bf16.msra.mxu0 0
    %114 = vmatprep.subr.bf16.mxu0 0
    %115 = vmatpush1.bf16.msra.mxu0 0
    %116 = vmatprep.subr.bf16.mxu0 0
    %117 = vmatpush1.bf16.msra.mxu0 0
    %118 = vmatprep.subr.bf16.mxu0 0
    %119 = vmatpush1.bf16.msra.mxu0 0
    %120 = vmatprep.subr.bf16.mxu0 0
    %121 = vmatpush1.bf16.msra.mxu0 0
    %122 = vmatprep.subr.bf16.mxu0 0
    %123 = vmatpush1.bf16.msra.mxu0 0
    %124 = vmatprep.subr.bf16.mxu0 0
    %125 = vmatpush1.bf16.msra.mxu0 0
    %126 = vmatprep.subr.bf16.mxu0 0
    %127 = vmatpush1.bf16.msra.mxu0 0
    %128 = vmatprep.subr.bf16.mxu0 0
    %129 = vmatpush1.bf16.msra.mxu0 0
    %130 = vmatprep.subr.bf16.mxu0 0
    %131 = vmatpush1.bf16.msra.mxu0 0
    %132 = vmatprep.subr.bf16.mxu0 0
    %133 = vmatpush1.bf16.msra.mxu0 0
    %134 = vmatprep.subr.bf16.mxu0 0
    %135 = vmatpush1.bf16.msra.mxu0 0
    %136 = vmatprep.mubr.bf16.mxu0 0
    %137 = vmatmul.mubr.bf16.gmra.mrb[0].mxu0 %v102
    %v138 = vpop.f32.mrb[0].mxu0
    %v139 = vadd.f32 %v87, %v138
    %v140 = vpop.f32.mrb[0].mxu0
    %v141 = vpop.f32.mrb[0].mxu0
    %v142 = vpop.f32.mrb[0].mxu0
    %143 = vdwg.mxu0
    %v144 = vmax.f32 %v139, 0.0
    %v145 = vpack.c.bf16 %v144, %v144
    %v146 = vld [vmem:[%s1 + $0x28] sm:$0xf]
    %v147 = vld [vmem:[%s1 + $0x2c] sm:$0xf]
    %v148 = vld [vmem:[%s1 + $0x30] sm:$0xf]
    %v149 = vld [vmem:[%s1 + $0x34] sm:$0xf]
    %v150 = vld [vmem:[%s1 + $0x38] sm:$0x1]
    %v151 = vunpack.c.l.bf16 %v150
    %v152 = vlaneseq
    %v153 = vshrl.u32 %v152, 7
    %v154 = vsub.s32 0, %v153
    %v155 = vrot.slane %v151, %v154
    %v160 = vunpack.c.l.b16 %v146
    %v161 = vunpack.c.l.b16 %v147
    %v162 = vunpack.c.l.b16 %v148
    %v163 = vunpack.c.l.b16 %v149
    %v164 = vpack.c.b16 %v161, %v160
    %v165 = vpack.c.b16 %v163, %v162
    %v169 = vsel %vm100, %v145, 0
    %171 = vmatprep.subr.bf16.mxu0 0
    %172 = vmatpush1.bf16.msra.mxu0 %v164
    %173 = vmatprep.subr.bf16.mxu0 0
    %174 = vmatpush1.bf16.msra.mxu0 %v165
    %175 = vmatprep.subr.bf16.mxu0 0
    %176 = vmatpush1.bf16.msra.mxu0 0
    %177 = vmatprep.subr.bf16.mxu0 0
    %178 = vmatpush1.bf16.msra.mxu0 0
    %179 = vmatprep.subr.bf16.mxu0 0
    %180 = vmatpush1.bf16.msra.mxu0 0
    %181 = vmatprep.subr.bf16.mxu0 0
    %182 = vmatpush1.bf16.msra.mxu0 0
    %183 = vmatprep.subr.bf16.mxu0 0
    %184 = vmatpush1.bf16.msra.mxu0 0
    %185 = vmatprep.subr.bf16.mxu0 0
    %186 = vmatpush1.bf16.msra.mxu0 0
    %187 = vmatprep.subr.bf16.mxu0 0
    %188 = vmatpush1.bf16.msra.mxu0 0
    %189 = vmatprep.subr.bf16.mxu0 0
    %190 = vmatpush1.bf16.msra.mxu0 0
    %191 = vmatprep.subr.bf16.mxu0 0
    %192 = vmatpush1.bf16.msra.mxu0 0
    %193 = vmatprep.subr.bf16.mxu0 0
    %194 = vmatpush1.bf16.msra.mxu0 0
    %195 = vmatprep.subr.bf16.mxu0 0
    %196 = vmatpush1.bf16.msra.mxu0 0
    %197 = vmatprep.subr.bf16.mxu0 0
    %198 = vmatpush1.bf16.msra.mxu0 0
    %199 = vmatprep.subr.bf16.mxu0 0
    %200 = vmatpush1.bf16.msra.mxu0 0
    %201 = vmatprep.subr.bf16.mxu0 0
    %202 = vmatpush1.bf16.msra.mxu0 0
    %203 = vmatprep.mubr.bf16.mxu0 0
    %204 = vmatmul.mubr.bf16.gmra.mrb[0].mxu0 %v169
    %v205 = vpop.f32.mrb[0].mxu0
    %v206 = vadd.f32 %v155, %v205
    %v207 = vpop.f32.mrb[0].mxu0
    %v208 = vpop.f32.mrb[0].mxu0
    %v209 = vpop.f32.mrb[0].mxu0
    %210 = vdwg.mxu0
    %v211 = vmax.f32 %v206, 0.0
    %v212 = vpack.c.bf16 %v211, %v211
    %v213 = vld [vmem:[%s2] sm:$0xf]
    %v214 = vld [vmem:[%s2 + $0x4] sm:$0xf]
    %v215 = vld [vmem:[%s2 + $0x8] sm:$0xf]
    %v216 = vld [vmem:[%s2 + $0xc] sm:$0xf]
    %v217 = vld [vmem:[%s2 + $0x10] sm:$0x1]
    %v218 = vunpack.c.l.bf16 %v217
    %v219 = vlaneseq
    %v220 = vshrl.u32 %v219, 7
    %v221 = vsub.s32 0, %v220
    %v222 = vrot.slane %v218, %v221
    %v227 = vunpack.c.l.b16 %v213
    %v228 = vunpack.c.l.b16 %v214
    %v229 = vunpack.c.l.b16 %v215
    %v230 = vunpack.c.l.b16 %v216
    %v231 = vpack.c.b16 %v228, %v227
    %v232 = vpack.c.b16 %v230, %v229
    %v236 = vsel %vm100, %v212, 0
    %238 = vmatprep.subr.bf16.mxu0 0
    %239 = vmatpush1.bf16.msra.mxu0 %v231
    %240 = vmatprep.subr.bf16.mxu0 0
    %241 = vmatpush1.bf16.msra.mxu0 %v232
    %242 = vmatprep.subr.bf16.mxu0 0
    %243 = vmatpush1.bf16.msra.mxu0 0
    %244 = vmatprep.subr.bf16.mxu0 0
    %245 = vmatpush1.bf16.msra.mxu0 0
    %246 = vmatprep.subr.bf16.mxu0 0
    %247 = vmatpush1.bf16.msra.mxu0 0
    %248 = vmatprep.subr.bf16.mxu0 0
    %249 = vmatpush1.bf16.msra.mxu0 0
    %250 = vmatprep.subr.bf16.mxu0 0
    %251 = vmatpush1.bf16.msra.mxu0 0
    %252 = vmatprep.subr.bf16.mxu0 0
    %253 = vmatpush1.bf16.msra.mxu0 0
    %254 = vmatprep.subr.bf16.mxu0 0
    %255 = vmatpush1.bf16.msra.mxu0 0
    %256 = vmatprep.subr.bf16.mxu0 0
    %257 = vmatpush1.bf16.msra.mxu0 0
    %258 = vmatprep.subr.bf16.mxu0 0
    %259 = vmatpush1.bf16.msra.mxu0 0
    %260 = vmatprep.subr.bf16.mxu0 0
    %261 = vmatpush1.bf16.msra.mxu0 0
    %262 = vmatprep.subr.bf16.mxu0 0
    %263 = vmatpush1.bf16.msra.mxu0 0
    %264 = vmatprep.subr.bf16.mxu0 0
    %265 = vmatpush1.bf16.msra.mxu0 0
    %266 = vmatprep.subr.bf16.mxu0 0
    %267 = vmatpush1.bf16.msra.mxu0 0
    %268 = vmatprep.subr.bf16.mxu0 0
    %269 = vmatpush1.bf16.msra.mxu0 0
    %270 = vmatprep.mubr.bf16.mxu0 0
    %271 = vmatmul.mubr.bf16.gmra.mrb[0].mxu0 %v236
    %v272 = vpop.f32.mrb[0].mxu0
    %v273 = vadd.f32 %v222, %v272
    %v274 = vpop.f32.mrb[0].mxu0
    %v275 = vpop.f32.mrb[0].mxu0
    %v276 = vpop.f32.mrb[0].mxu0
    %277 = vdwg.mxu0
    %vm278 = vcmask 64512
    %279 = vst.msk [vmem:[#allocation2] sm:$0xff] %vm278, %v273
    // Predicated region
    $region14: #{tpu_custom_call.1} parent=1 // pred_check
      _
    $region15: #{tpu_custom_call.1} parent=1 // pred_check_branch
      %281 = sbr.rel (0) target = $region17
    $region16: #{tpu_custom_call.1} parent=1 // pred_region
      %s283 = ssub.s32 128, 128
      %284 = vsyncadd [#allocation3], %s283
      %s286 = sshll.u32 [#allocation2], 4
      %s287 = int_to_ptr.vmem [resolvable:$true] %s286
      %289 = dma.vmem_to_hbm [thread:$0]  %s287, 128, %s3, [#allocation3]
    $region17: #{tpu_custom_call.1} parent=1 // pred_fallthru
      _
    // Predicated region
    $region18: #{tpu_custom_call.1} parent=1 // pred_check
      _
    $region19: #{tpu_custom_call.1} parent=1 // pred_check_branch
      %291 = sbr.rel (0) target = $region21
    $region20: #{tpu_custom_call.1} parent=1 // pred_region
      %292 = dma.done [#allocation3], 128
    $region21: #{tpu_custom_call.1} parent=1 // pred_fallthru
      _
    %293 = vsyncpa [#allocation3], 1

</llo_original>
